<compile_context>
chip_gen: v7x
topology: tpu7x:2x2x1
jax: 0.10.0
libtpu: 0.0.40
codegen_flags: <defaults>
</compile_context>

<pallas_src>
import functools

import jax
import jax.numpy as jnp
from jax.experimental import pallas as pl
from jax.experimental.pallas import tpu as pltpu


def _round_up(n, m=8):
    return ((n + m - 1) // m) * m


def pack_params(w1, b1, w2, b2):
    """Pack (W1 [H,S], b1 [H], W2 [A,H], b2 [A]) into one small f32 buffer.

    Feature-major layout (matches the in-kernel math):
      rows [0 : H),              cols [0 : S)  -> W1
      rows [0 : H),              col   S       -> b1 (column vector)
      rows [off_w2 : off_w2+A),  cols [0 : H)  -> W2
      rows [off_w2 : off_w2+A),  col   H       -> b2 (column vector)
    """
    H, S = w1.shape
    A, H2 = w2.shape
    assert H2 == H
    off_w2 = _round_up(H)                 # 32
    rows = off_w2 + _round_up(A)          # 40 (multiple of 8)
    cols = max(S, H) + 1                  # 33
    p = jnp.zeros((rows, cols), jnp.float32)
    p = p.at[0:H, 0:S].set(w1)
    p = p.at[0:H, S].set(b1.reshape(H))
    p = p.at[off_w2:off_w2 + A, 0:H].set(w2)
    p = p.at[off_w2:off_w2 + A, H].set(b2.reshape(A))
    return p, off_w2


def actor_kernel(xT_ref, p_ref, outT_ref, *, state_dim, hidden, action_dim, off_w2):
    S, H, A = state_dim, hidden, action_dim

    # Static slices of the resident packed-parameter block (tiny).
    w1 = p_ref[0:H, 0:S]                      # [H, S]
    b1 = p_ref[0:H, S:S + 1]                  # [H, 1]
    w2 = p_ref[off_w2:off_w2 + A, 0:H]        # [A, H]
    b2 = p_ref[off_w2:off_w2 + A, H:H + 1]    # [A, 1]

    xT = xT_ref[...]                          # [S, block_b]  (batch on lanes)

    # Layer 1: Linear + ReLU (MXU matmul, f32 accumulation) -> [H, block_b]
    h = jnp.dot(w1, xT, preferred_element_type=jnp.float32) + b1
    h = jnp.maximum(h, 0.0)

    # Layer 2: Linear -> [A, block_b]
    logits = jnp.dot(w2, h, preferred_element_type=jnp.float32) + b2

    # Numerically-stable softmax over the action (sublane) axis.
    # Exact division so rows sum to 1 (feeds a categorical sampler downstream).
    m = jnp.max(logits, axis=0, keepdims=True)            # [1, block_b]
    e = jnp.exp(logits - m)                                # [A, block_b]
    denom = jnp.sum(e, axis=0, keepdims=True)              # [1, block_b]
    outT_ref[...] = (e / denom).astype(outT_ref.dtype)


def actor_forward(x, packed_params, off_w2, *, state_dim, hidden, action_dim,
                  block_b=512):
    """x: [B, state_dim] f32; returns action_probs [B, action_dim] f32."""
    B = x.shape[0]
    block_b = min(block_b, _round_up(B, 128))      # never bigger than needed
    nb = pl.cdiv(B, block_b)
    Bp = nb * block_b
    if nb > 1:
        assert block_b % 128 == 0, "block_b must be a lane multiple when tiling"

    # Feature-major (lane-dense) layout: batch on the 128-lane axis.
    xT = x.T                                       # [S, B]
    if Bp != B:                                    # pad batch; extra cols sliced off
        xT = jnp.pad(xT, ((0, 0), (0, Bp - B)))

    kernel = functools.partial(
        actor_kernel,
        state_dim=state_dim, hidden=hidden, action_dim=action_dim, off_w2=off_w2,
    )

    outT = pl.pallas_call(
        kernel,
        out_shape=jax.ShapeDtypeStruct((action_dim, Bp), jnp.float32),
        grid=(nb,),
        in_specs=[
            # Activations: one (S, block_b) lane-dense tile per grid step.
            pl.BlockSpec((state_dim, block_b), lambda i: (0, i)),
            # Packed weights+biases: single small block, resident across grid.
            pl.BlockSpec(packed_params.shape, lambda i: (0, 0)),
        ],
        out_specs=pl.BlockSpec((action_dim, block_b), lambda i: (0, i)),
        compiler_params=pltpu.CompilerParams(
            dimension_semantics=("parallel",),     # one block per TC on v7x
        ),
    )(xT, packed_params)

    return outT[:, :B].T                           # back to [B, action_dim]


def init_params(key, state_dim, action_dim, hidden):
    """Deterministic init mimicking PyTorch nn.Linear default (uniform +/- 1/sqrt(fan_in)).

    Weights kept in PyTorch orientation: W1 [hidden, state_dim], W2 [action_dim, hidden].
    """
    k1, k2, k3, k4 = jax.random.split(key, 4)
    bound1 = 1.0 / jnp.sqrt(jnp.float32(state_dim))
    bound2 = 1.0 / jnp.sqrt(jnp.float32(hidden))
    w1 = jax.random.uniform(k1, (hidden, state_dim), jnp.float32, -bound1, bound1)
    b1 = jax.random.uniform(k2, (hidden,), jnp.float32, -bound1, bound1)
    w2 = jax.random.uniform(k3, (action_dim, hidden), jnp.float32, -bound2, bound2)
    b2 = jax.random.uniform(k4, (action_dim,), jnp.float32, -bound2, bound2)
    return w1, b1, w2, b2


def actor_reference(x, w1, b1, w2, b2):
    hi = jax.lax.Precision.HIGHEST
    h = jnp.maximum(jnp.dot(x, w1.T, precision=hi) + b1[None, :], 0.0)
    logits = jnp.dot(h, w2.T, precision=hi) + b2[None, :]
    return jax.nn.softmax(logits, axis=-1)


if __name__ == "__main__":
    # Acrobot-v1: state_dim=6, action_dim=3; hidden=32 per the module default.
    # Batch many env states per call; block_b=512 -> grid of 2 (one block per v7x TC).
    STATE_DIM, ACTION_DIM, HIDDEN, BATCH, BLOCK_B = 6, 3, 32, 1024, 512

    key = jax.random.PRNGKey(0)
    kx, kp = jax.random.split(key)
    x = jax.random.normal(kx, (BATCH, STATE_DIM), jnp.float32)
    w1, b1, w2, b2 = init_params(kp, STATE_DIM, ACTION_DIM, HIDDEN)
    packed, off_w2 = pack_params(w1, b1, w2, b2)

    probs = jax.block_until_ready(
        actor_forward(x, packed, off_w2,
                      state_dim=STATE_DIM, hidden=HIDDEN, action_dim=ACTION_DIM,
                      block_b=BLOCK_B)
    )

    # Correctness check against pure-JAX reference.
    ref = actor_reference(x, w1, b1, w2, b2)
    assert probs.shape == (BATCH, ACTION_DIM)
    assert jnp.allclose(probs, ref, atol=1e-3, rtol=1e-3)
    # Exact divide in the kernel: every row sums to 1 within f32 rounding.
    assert jnp.allclose(jnp.sum(probs, axis=-1), 1.0, atol=1e-5)

    print("KERNEL_OK")
</pallas_src>

<mosaic_0001>
module attributes {stable_mosaic.version = 11 : i64} {
  func.func @actor_kernel(%arg0: i32, %arg1: memref<6x512xf32, #tpu.memory_space<vmem>>, %arg2: memref<40x33xf32, #tpu.memory_space<vmem>>, %arg3: memref<3x512xf32, #tpu.memory_space<vmem>>) attributes {dimension_semantics = [#tpu.dimension_semantics<parallel>], iteration_bounds = array<i64: 2>, scalar_prefetch = 0 : i64, scratch_operands = 0 : i64, tpu.core_type = #tpu.core_type<tc>, window_params = [{transform_indices = @transform_0, window_bounds = array<i64: 6, 512>}, {pipeline_mode = #tpu.pipeline_mode<synchronous>, transform_indices = @transform_1, window_bounds = array<i64: 40, 33>}, {transform_indices = @transform_2, window_bounds = array<i64: 3, 512>}]} {
    %c0 = arith.constant 0 : index
    %c0_0 = arith.constant 0 : index
    %0 = vector.load %arg2[%c0, %c0_0] : memref<40x33xf32, #tpu.memory_space<vmem>>, vector<32x6xf32>
    %c0_1 = arith.constant 0 : index
    %c6 = arith.constant 6 : index
    %1 = vector.load %arg2[%c0_1, %c6] : memref<40x33xf32, #tpu.memory_space<vmem>>, vector<32x1xf32>
    %c32 = arith.constant 32 : index
    %c0_2 = arith.constant 0 : index
    %2 = vector.load %arg2[%c32, %c0_2] : memref<40x33xf32, #tpu.memory_space<vmem>>, vector<3x32xf32>
    %c32_3 = arith.constant 32 : index
    %c32_4 = arith.constant 32 : index
    %3 = vector.load %arg2[%c32_3, %c32_4] : memref<40x33xf32, #tpu.memory_space<vmem>>, vector<3x1xf32>
    %c0_5 = arith.constant 0 : index
    %c0_6 = arith.constant 0 : index
    %4 = vector.load %arg1[%c0_5, %c0_6] : memref<6x512xf32, #tpu.memory_space<vmem>>, vector<6x512xf32>
    %cst = arith.constant dense<0.000000e+00> : vector<32x512xf32>
    %5 = tpu.matmul %0, %4, %cst {dimension_numbers = #tpu.dot_dimension_numbers<[1], [0], [0], [1], [0, 0, 1, 1], [], []>} : vector<32x6xf32>, vector<6x512xf32>, vector<32x512xf32> -> vector<32x512xf32>
    %6 = vector.broadcast %1 : vector<32x1xf32> to vector<32x512xf32>
    %7 = arith.addf %5, %6 : vector<32x512xf32>
    %cst_7 = arith.constant 0.000000e+00 : f32
    %8 = vector.broadcast %cst_7 : f32 to vector<32x512xf32>
    %9 = arith.maximumf %7, %8 : vector<32x512xf32>
    %cst_8 = arith.constant dense<0.000000e+00> : vector<3x512xf32>
    %10 = tpu.matmul %2, %9, %cst_8 {dimension_numbers = #tpu.dot_dimension_numbers<[1], [0], [0], [1], [0, 0, 1, 1], [], []>} : vector<3x32xf32>, vector<32x512xf32>, vector<3x512xf32> -> vector<3x512xf32>
    %11 = vector.broadcast %3 : vector<3x1xf32> to vector<3x512xf32>
    %12 = arith.addf %10, %11 : vector<3x512xf32>
    %cst_9 = arith.constant dense<0xFF800000> : vector<512xf32>
    %13 = vector.multi_reduction <maximumf>, %12, %cst_9 [0] : vector<3x512xf32> to vector<512xf32>
    %14 = vector.shape_cast %13 : vector<512xf32> to vector<1x512xf32>
    %15 = vector.broadcast %14 : vector<1x512xf32> to vector<3x512xf32>
    %16 = arith.subf %12, %15 : vector<3x512xf32>
    %17 = math.exp %16 : vector<3x512xf32>
    %cst_10 = arith.constant dense<0.000000e+00> : vector<512xf32>
    %18 = vector.multi_reduction <add>, %17, %cst_10 [0] : vector<3x512xf32> to vector<512xf32>
    %19 = vector.shape_cast %18 : vector<512xf32> to vector<1x512xf32>
    %20 = vector.broadcast %19 : vector<1x512xf32> to vector<3x512xf32>
    %21 = arith.divf %17, %20 : vector<3x512xf32>
    %c0_11 = arith.constant 0 : index
    %c0_12 = arith.constant 0 : index
    %22 = vector.load %arg3[%c0_11, %c0_12] : memref<3x512xf32, #tpu.memory_space<vmem>>, vector<3x512xf32>
    tpu.vector_store %arg3[%c0_11, %c0_12], %21 {strides = array<i32>} : memref<3x512xf32, #tpu.memory_space<vmem>>, vector<3x512xf32>,
    return
  }
  func.func @transform_0(%arg0: i32) -> (i32, i32) {
    %c0_i32 = arith.constant 0 : i32
    %c0_i32_0 = arith.constant 0 : i32
    return %c0_i32, %arg0 : i32, i32
  }
  func.func @transform_1(%arg0: i32) -> (i32, i32) {
    %c0_i32 = arith.constant 0 : i32
    %c0_i32_0 = arith.constant 0 : i32
    %c0_i32_1 = arith.constant 0 : i32
    return %c0_i32, %c0_i32_0 : i32, i32
  }
  func.func @transform_2(%arg0: i32) -> (i32, i32) {
    %c0_i32 = arith.constant 0 : i32
    %c0_i32_0 = arith.constant 0 : i32
    return %c0_i32, %arg0 : i32, i32
  }
}

</mosaic_0001>

<llo_original>
// kernel: tpu_custom_call.1
$region0: #{tpu_custom_call.1}
  #allocation0 [shape = 'u32[]', space=smem, size = 0x4, offset = 0x4, fixed_abs, tag = 'smem constant byte address 0x4 - core index']
  #allocation1 [shape = 'u32[144,128]{1,0:T(1,128)}', space=vmem, size = 0x12000, scoped, tag = 'internal scratch']
  %s0 = inlined_call_operand.hbm [shape: f32[6,1024], index: 0, kind: input, shape index: {}]
  %s1 = inlined_call_operand.hbm [shape: f32[40,33], index: 1, kind: input, shape index: {}]
  %s2 = inlined_call_operand.hbm [shape: f32[3,1024], index: 2, kind: output, shape index: {}]
  %s3 = sld [smem:[#allocation0]]
  $region49: #{tpu_custom_call.1} parent=0
    _
  %s5 = ssub.s32 1, %s3
  %s6 = scalar_select 0, %s5, %s3
  $region1: #{tpu_custom_call.1} parent=0
    #allocation2 [shape = 'u8[32768]{0}', space=vmem, size = 0x8000, scoped, tag = 'input window, operand 0']
    #allocation3 [shape = 's32[2]{0}', space=sflag, size = 0x8, scoped, tag = 'scoped memory for tpu_custom_call.1']
    #allocation4 [shape = 's32[2]{0}', space=sflag, size = 0x8, scoped, tag = 'scoped memory for tpu_custom_call.1']
    #allocation5 [shape = 'u8[20480]{0}', space=vmem, size = 0x5000, scoped, tag = 'input window, operand 1, single buffered']
    #allocation6 [shape = 's32[1]{0}', space=sflag, size = 0x4, scoped, tag = 'scoped memory for tpu_custom_call.1']
    #allocation7 [shape = 'u8[16384]{0}', space=vmem, size = 0x4000, scoped, tag = 'output window, operand 0']
    %7 = vsyncpa [#allocation3], 0
    %s8 = scalar_lea.sflag [#allocation3], 1
    %9 = vsyncpa %s8, 0
    %10 = vsyncpa [#allocation6], 0
    %11 = vsyncpa [#allocation4], 0
    %s12 = scalar_lea.sflag [#allocation4], 1
    %13 = vsyncpa %s12, 0
    loop: start=0, step=1, limit=4
    $region2: #{tpu_custom_call.1} parent=1 // loop_pre_header
      _
    $region3: #{tpu_custom_call.1} parent=1 // loop_header
      %s15 = sphi 0, %s19
      %p16 = scmp.ge.s32.totalorder %s15, 4
      %s25 = sphi 0, %s27
      %s28 = sphi 0, %s25
      %s29 = sphi 0, %s28
      %s45 = sphi 0, %s29
      %s49 = sphi 0, %s49
      %s51 = sphi 0, %s49
      %s52 = sphi 0, %s51
      %s66 = sphi 0, %s52
      %s72 = sphi 0, %s74
      %s75 = sphi 0, %s72
      %s76 = sphi 0, %s75
      %s92 = sphi 0, %s76
    $region4: #{tpu_custom_call.1} parent=1 // loop_header_branch
      %18 = sbr.rel (%p16) target = $region8
    $region5: #{tpu_custom_call.1} parent=1 // loop_body
      %s20 = ssub.s32 %s15, 1
      %s21 = ssub.s32 %s15, 2
      %s22 = sadd.s32 %s15, 1
      %s23 = ssub.s32 %s15, %s22
      %p24 = scmp.eq.s32.totalorder %s23, 0
      %s26 = sadd.s32 %s25, 1
      %s27 = scalar_select %p24, %s25, %s26
      %p30 = pneg %p24
      %p31 = scmp.eq.s32.totalorder %s15, 1
      %p32 = por %p30, %p31
      %p33 = scmp.ne.s32.totalorder %s25, %s28
      %p34 = scmp.eq.s32.totalorder %s15, 0
      %p35 = por %p33, %p34
      %p36 = scmp.ne.s32.totalorder %s25, %s28
      %p37 = scmp.eq.s32.totalorder %s20, 1
      %p38 = por %p36, %p37
      %p39 = scmp.ne.s32.totalorder %s28, %s29
      %p40 = scmp.eq.s32.totalorder %s20, 0
      %p41 = por %p39, %p40
      %p42 = scmp.ne.s32.totalorder %s28, %s29
      %p43 = scmp.eq.s32.totalorder %s21, 1
      %p44 = por %p42, %p43
      %p46 = scmp.ne.s32.totalorder %s29, %s45
      %p47 = scmp.eq.s32.totalorder %s21, 0
      %p48 = por %p46, %p47
      %s50 = sadd.s32 %s49, 1
      %p53 = scmp.eq.s32.totalorder %s15, 1
      %p54 = scmp.ne.s32.totalorder %s49, %s51
      %p55 = scmp.eq.s32.totalorder %s15, 0
      %p56 = por %p54, %p55
      %p57 = scmp.ne.s32.totalorder %s49, %s51
      %p58 = scmp.eq.s32.totalorder %s20, 1
      %p59 = por %p57, %p58
      %p60 = scmp.ne.s32.totalorder %s51, %s52
      %p61 = scmp.eq.s32.totalorder %s20, 0
      %p62 = por %p60, %p61
      %p63 = scmp.ne.s32.totalorder %s51, %s52
      %p64 = scmp.eq.s32.totalorder %s21, 1
      %p65 = por %p63, %p64
      %p67 = scmp.ne.s32.totalorder %s52, %s66
      %p68 = scmp.eq.s32.totalorder %s21, 0
      %p69 = por %p67, %p68
      %s70 = ssub.s32 %s15, %s22
      %p71 = scmp.eq.s32.totalorder %s70, 0
      %s73 = sadd.s32 %s72, 1
      %s74 = scalar_select %p71, %s72, %s73
      %p77 = pneg %p71
      %p78 = scmp.eq.s32.totalorder %s15, 1
      %p79 = por %p77, %p78
      %p80 = scmp.ne.s32.totalorder %s72, %s75
      %p81 = scmp.eq.s32.totalorder %s15, 0
      %p82 = por %p80, %p81
      %p83 = scmp.ne.s32.totalorder %s72, %s75
      %p84 = scmp.eq.s32.totalorder %s20, 1
      %p85 = por %p83, %p84
      %p86 = scmp.ne.s32.totalorder %s75, %s76
      %p87 = scmp.eq.s32.totalorder %s20, 0
      %p88 = por %p86, %p87
      %p89 = scmp.ne.s32.totalorder %s75, %s76
      %p90 = scmp.eq.s32.totalorder %s21, 1
      %p91 = por %p89, %p90
      %p93 = scmp.ne.s32.totalorder %s76, %s92
      %p94 = scmp.eq.s32.totalorder %s21, 0
      %p95 = por %p93, %p94
      %p96 = scmp.le.s32.totalorder 1, %s15
      %p97 = scmp.lt.s32.totalorder %s15, 3
      %p98 = pnand %p96, %p97
      %p99 = pneg %p98
      // Predicated region
      $region9: #{tpu_custom_call.1} parent=5 // pred_check
        _
      $region10: #{tpu_custom_call.1} parent=5 // pred_check_branch
        %101 = sbr.rel (%p98) target = $region12
      $region11: #{tpu_custom_call.1} parent=5 // pred_region
        %s102 = ssub.s32 %s15, 1
        // Predicated region
        $region13: #{tpu_custom_call.1} parent=11 // pred_check
          %p103 = pneg %p62
        $region14: #{tpu_custom_call.1} parent=11 // pred_check_branch
          %105 = sbr.rel (%p103) target = $region16
        $region15: #{tpu_custom_call.1} parent=11 // pred_region
          %s107 = ssub.s32 640, 640
          %108 = vsyncadd [#allocation6], %s107
          %s109 = sshll.u32 [#allocation5], 4
          %s110 = int_to_ptr.vmem [resolvable:$true] %s109
          %115 = dma.hbm_to_vmem [thread:$0]  %s1, 640, %s110, [#allocation6], 128, 128, 8
        $region16: #{tpu_custom_call.1} parent=11 // pred_fallthru
          _
      $region12: #{tpu_custom_call.1} parent=5 // pred_fallthru
        _
      %p116 = scmp.lt.s32.totalorder %s15, 2
      // Predicated region
      $region17: #{tpu_custom_call.1} parent=5 // pred_check
        %p117 = pneg %p116
      $region18: #{tpu_custom_call.1} parent=5 // pred_check_branch
        %119 = sbr.rel (%p117) target = $region20
      $region19: #{tpu_custom_call.1} parent=5 // pred_region
        // Predicated region
        $region21: #{tpu_custom_call.1} parent=19 // pred_check
          %p120 = pneg %p35
        $region22: #{tpu_custom_call.1} parent=19 // pred_check_branch
          %122 = sbr.rel (%p120) target = $region24
        $region23: #{tpu_custom_call.1} parent=19 // pred_region
          %s123 = sand.u32 %s25, 1
          %s124 = scalar_lea.sflag [#allocation3], %s123
          %s125 = sand.u32 %s25, 1
          %s126 = smul.addr %s125, 32
          %s127 = scalar_lea.vmem [#allocation2], %s126
          %s128 = smul.u32 4, %s15
          %s130 = ssub.s32 512, 512
          %131 = vsyncadd %s124, %s130
          %s132 = smul.addr %s128, 128
          %s133 = scalar_lea.hbm %s0, %s132
          %s135 = sshll.u32 %s127, 4
          %s136 = int_to_ptr.vmem [resolvable:$true] %s135
          %138 = dma.hbm_to_vmem [thread:$0]  %s133, 512, %s136, %s124
        $region24: #{tpu_custom_call.1} parent=19 // pred_fallthru
          _
      $region20: #{tpu_custom_call.1} parent=5 // pred_fallthru
        _
      %p139 = scmp.le.s32.totalorder 1, %s15
      %p140 = scmp.lt.s32.totalorder %s15, 3
      %p141 = pnand %p139, %p140
      %p142 = pneg %p141
      // Predicated region
      $region25: #{tpu_custom_call.1} parent=5 // pred_check
        _
      $region26: #{tpu_custom_call.1} parent=5 // pred_check_branch
        %144 = sbr.rel (%p141) target = $region28
      $region27: #{tpu_custom_call.1} parent=5 // pred_region
        %s145 = ssub.s32 %s15, 1
        %s146 = sand.u32 %s28, 1
        %s147 = scalar_lea.sflag [#allocation3], %s146
        %s148 = sand.u32 %s28, 1
        %s149 = smul.addr %s148, 32
        %s150 = scalar_lea.vmem [#allocation2], %s149
        // Predicated region
        $region29: #{tpu_custom_call.1} parent=27 // pred_check
          %p151 = pneg %p41
        $region30: #{tpu_custom_call.1} parent=27 // pred_check_branch
          %153 = sbr.rel (%p151) target = $region32
        $region31: #{tpu_custom_call.1} parent=27 // pred_region
          %154 = dma.done %s147, 512
        $region32: #{tpu_custom_call.1} parent=27 // pred_fallthru
          _
        // Predicated region
        $region33: #{tpu_custom_call.1} parent=27 // pred_check
          %p155 = pneg %p62
        $region34: #{tpu_custom_call.1} parent=27 // pred_check_branch
          %157 = sbr.rel (%p155) target = $region36
        $region35: #{tpu_custom_call.1} parent=27 // pred_region
          %158 = dma.done [#allocation6], 640
        $region36: #{tpu_custom_call.1} parent=27 // pred_fallthru
          _
        %s159 = sand.u32 %s28, 1
        %s160 = scalar_lea.sflag [#allocation3], %s159
        %s161 = sand.u32 %s28, 1
        %s162 = smul.addr %s161, 32
        %s163 = scalar_lea.vmem [#allocation2], %s162
        %p164 = pneg %p41
        %p165 = pneg %p38
        %p166 = pneg %p62
        %p167 = pneg %p59
        %p168 = pneg %p88
        %p169 = pneg %p85
        %s170 = sand.u32 %s75, 1
        %s171 = scalar_lea.sflag [#allocation4], %s170
        %s172 = sand.u32 %s75, 1
        %s173 = smul.addr %s172, 16
        %s174 = scalar_lea.vmem [#allocation7], %s173
        %s175 = smul.u32 4, %s20
        %s176 = smul.u32 4, %s20
        %v177 = vld [vmem:[#allocation5] sm:$0xff]
        %v178 = vld [vmem:[#allocation5 + $0x8] sm:$0xff]
        %v179 = vld [vmem:[#allocation5 + $0x10] sm:$0xff]
        %v180 = vld [vmem:[#allocation5 + $0x18] sm:$0xff]
        %v181 = vld [vmem:[#allocation5 + $0x20] sm:$0x7]
        %v182 = vld [vmem:[%s150] sm:$0x3f]
        %v183 = vld [vmem:[%s150 + $0x8] sm:$0x3f]
        %v184 = vld [vmem:[%s150 + $0x10] sm:$0x3f]
        %v185 = vld [vmem:[%s150 + $0x18] sm:$0x3f]
        %187 = vset.pattern.permute.xlu0 6
        %188 = vperm.xlu0 %187, %v177
        %v189 = vpop.permute.xlu0 %188
        %192 = vset.pattern.permute.xlu0 6
        %193 = vperm.xlu0 %192, %v178
        %v194 = vpop.permute.xlu0 %193
        %197 = vset.pattern.permute.xlu0 6
        %198 = vperm.xlu0 %197, %v179
        %v199 = vpop.permute.xlu0 %198
        %202 = vset.pattern.permute.xlu0 6
        %203 = vperm.xlu0 %202, %v180
        %v204 = vpop.permute.xlu0 %203
        %vm206 = vcmask 48128
        %v207 = vsel %vm206, %v177, 0
        %v209 = vsel %vm206, %v178, 0
        %v211 = vsel %vm206, %v179, 0
        %v213 = vsel %vm206, %v180, 0
        %vm215 = vcmask 1045504
        %v217 = vsel %vm215, %v182, 0
        %v220 = vsel %vm215, %v183, 0
        %v223 = vsel %vm215, %v184, 0
        %v226 = vsel %vm215, %v185, 0
        %228 = vmatprep.subr.mxu0 %v220
        %229 = vmatpush1.msra.mxu0 %v217
        %230 = vmatprep.subr.mxu0 0.0
        %231 = vmatpush1.msra.mxu0 0.0
        %232 = vmatprep.subr.mxu0 0.0
        %233 = vmatpush1.msra.mxu0 0.0
        %234 = vmatprep.subr.mxu0 0.0
        %235 = vmatpush1.msra.mxu0 0.0
        %236 = vmatprep.subr.mxu0 0.0
        %237 = vmatpush1.msra.mxu0 0.0
        %238 = vmatprep.subr.mxu0 0.0
        %239 = vmatpush1.msra.mxu0 0.0
        %240 = vmatprep.subr.mxu0 0.0
        %241 = vmatpush1.msra.mxu0 0.0
        %242 = vmatprep.subr.mxu0 0.0
        %243 = vmatpush1.msra.mxu0 0.0
        %244 = vmatprep.subr.mxu0 0.0
        %245 = vmatpush1.msra.mxu0 0.0
        %246 = vmatprep.subr.mxu0 0.0
        %247 = vmatpush1.msra.mxu0 0.0
        %248 = vmatprep.subr.mxu0 0.0
        %249 = vmatpush1.msra.mxu0 0.0
        %250 = vmatprep.subr.mxu0 0.0
        %251 = vmatpush1.msra.mxu0 0.0
        %252 = vmatprep.subr.mxu0 0.0
        %253 = vmatpush1.msra.mxu0 0.0
        %254 = vmatprep.subr.mxu0 0.0
        %255 = vmatpush1.msra.mxu0 0.0
        %256 = vmatprep.subr.mxu0 0.0
        %257 = vmatpush1.msra.mxu0 0.0
        %258 = vmatprep.subr.mxu0 0.0
        %259 = vmatpush1.msra.mxu0 0.0
        %260 = vmatprep.subr.mxu0 0.0
        %261 = vmatpush1.msra.mxu0 0.0
        %262 = vmatprep.subr.mxu0 0.0
        %263 = vmatpush1.msra.mxu0 0.0
        %264 = vmatprep.subr.mxu0 0.0
        %265 = vmatpush1.msra.mxu0 0.0
        %266 = vmatprep.subr.mxu0 0.0
        %267 = vmatpush1.msra.mxu0 0.0
        %268 = vmatprep.subr.mxu0 0.0
        %269 = vmatpush1.msra.mxu0 0.0
        %270 = vmatprep.subr.mxu0 0.0
        %271 = vmatpush1.msra.mxu0 0.0
        %272 = vmatprep.subr.mxu0 0.0
        %273 = vmatpush1.msra.mxu0 0.0
        %274 = vmatprep.subr.mxu0 0.0
        %275 = vmatpush1.msra.mxu0 0.0
        %276 = vmatprep.subr.mxu0 0.0
        %277 = vmatpush1.msra.mxu0 0.0
        %278 = vmatprep.subr.mxu0 0.0
        %279 = vmatpush1.msra.mxu0 0.0
        %280 = vmatprep.subr.mxu0 0.0
        %281 = vmatpush1.msra.mxu0 0.0
        %282 = vmatprep.subr.mxu0 0.0
        %283 = vmatpush1.msra.mxu0 0.0
        %284 = vmatprep.subr.mxu0 0.0
        %285 = vmatpush1.msra.mxu0 0.0
        %286 = vmatprep.subr.mxu0 0.0
        %287 = vmatpush1.msra.mxu0 0.0
        %288 = vmatprep.subr.mxu0 0.0
        %289 = vmatpush1.msra.mxu0 0.0
        %290 = vmatprep.subr.mxu0 0.0
        %291 = vmatpush1.msra.mxu0 0.0
        %292 = vmatprep.mubr.f32.mxu0 0.0
        %293 = vmatmul.mubr.f32.gmra.mrb[0].mxu0 %v207
        %v294 = vpop.f32.mrb[0].mxu0
        %v295 = vadd.f32 %v189, %v294
        %v296 = vpop.f32.mrb[0].mxu0
        %v297 = vadd.f32 %v189, %v296
        %298 = vmatprep.mubr.f32.mxu0 0.0
        %299 = vmatmul.mubr.f32.gmra.mrb[0].mxu0 %v209
        %v300 = vpop.f32.mrb[0].mxu0
        %v301 = vadd.f32 %v194, %v300
        %v302 = vpop.f32.mrb[0].mxu0
        %v303 = vadd.f32 %v194, %v302
        %304 = vmatprep.mubr.f32.mxu0 0.0
        %305 = vmatmul.mubr.f32.gmra.mrb[0].mxu0 %v211
        %v306 = vpop.f32.mrb[0].mxu0
        %v307 = vadd.f32 %v199, %v306
        %v308 = vpop.f32.mrb[0].mxu0
        %v309 = vadd.f32 %v199, %v308
        %310 = vmatprep.mubr.f32.mxu0 0.0
        %311 = vmatmul.mubr.f32.gmra.mrb[0].mxu0 %v213
        %v312 = vpop.f32.mrb[0].mxu0
        %v313 = vadd.f32 %v204, %v312
        %v314 = vpop.f32.mrb[0].mxu0
        %v315 = vadd.f32 %v204, %v314
        %316 = vdwg.mxu0
        %317 = vmatprep.subr.mxu0 %v226
        %318 = vmatpush1.msra.mxu0 %v223
        %319 = vmatprep.subr.mxu0 0.0
        %320 = vmatpush1.msra.mxu0 0.0
        %321 = vmatprep.subr.mxu0 0.0
        %322 = vmatpush1.msra.mxu0 0.0
        %323 = vmatprep.subr.mxu0 0.0
        %324 = vmatpush1.msra.mxu0 0.0
        %325 = vmatprep.subr.mxu0 0.0
        %326 = vmatpush1.msra.mxu0 0.0
        %327 = vmatprep.subr.mxu0 0.0
        %328 = vmatpush1.msra.mxu0 0.0
        %329 = vmatprep.subr.mxu0 0.0
        %330 = vmatpush1.msra.mxu0 0.0
        %331 = vmatprep.subr.mxu0 0.0
        %332 = vmatpush1.msra.mxu0 0.0
        %333 = vmatprep.subr.mxu0 0.0
        %334 = vmatpush1.msra.mxu0 0.0
        %335 = vmatprep.subr.mxu0 0.0
        %336 = vmatpush1.msra.mxu0 0.0
        %337 = vmatprep.subr.mxu0 0.0
        %338 = vmatpush1.msra.mxu0 0.0
        %339 = vmatprep.subr.mxu0 0.0
        %340 = vmatpush1.msra.mxu0 0.0
        %341 = vmatprep.subr.mxu0 0.0
        %342 = vmatpush1.msra.mxu0 0.0
        %343 = vmatprep.subr.mxu0 0.0
        %344 = vmatpush1.msra.mxu0 0.0
        %345 = vmatprep.subr.mxu0 0.0
        %346 = vmatpush1.msra.mxu0 0.0
        %347 = vmatprep.subr.mxu0 0.0
        %348 = vmatpush1.msra.mxu0 0.0
        %349 = vmatprep.subr.mxu0 0.0
        %350 = vmatpush1.msra.mxu0 0.0
        %351 = vmatprep.subr.mxu0 0.0
        %352 = vmatpush1.msra.mxu0 0.0
        %353 = vmatprep.subr.mxu0 0.0
        %354 = vmatpush1.msra.mxu0 0.0
        %355 = vmatprep.subr.mxu0 0.0
        %356 = vmatpush1.msra.mxu0 0.0
        %357 = vmatprep.subr.mxu0 0.0
        %358 = vmatpush1.msra.mxu0 0.0
        %359 = vmatprep.subr.mxu0 0.0
        %360 = vmatpush1.msra.mxu0 0.0
        %361 = vmatprep.subr.mxu0 0.0
        %362 = vmatpush1.msra.mxu0 0.0
        %363 = vmatprep.subr.mxu0 0.0
        %364 = vmatpush1.msra.mxu0 0.0
        %365 = vmatprep.subr.mxu0 0.0
        %366 = vmatpush1.msra.mxu0 0.0
        %367 = vmatprep.subr.mxu0 0.0
        %368 = vmatpush1.msra.mxu0 0.0
        %369 = vmatprep.subr.mxu0 0.0
        %370 = vmatpush1.msra.mxu0 0.0
        %371 = vmatprep.subr.mxu0 0.0
        %372 = vmatpush1.msra.mxu0 0.0
        %373 = vmatprep.subr.mxu0 0.0
        %374 = vmatpush1.msra.mxu0 0.0
        %375 = vmatprep.subr.mxu0 0.0
        %376 = vmatpush1.msra.mxu0 0.0
        %377 = vmatprep.subr.mxu0 0.0
        %378 = vmatpush1.msra.mxu0 0.0
        %379 = vmatprep.subr.mxu0 0.0
        %380 = vmatpush1.msra.mxu0 0.0
        %381 = vmatprep.mubr.f32.mxu0 0.0
        %382 = vmatmul.mubr.f32.gmra.mrb[0].mxu0 %v207
        %v383 = vpop.f32.mrb[0].mxu0
        %v384 = vadd.f32 %v189, %v383
        %v385 = vpop.f32.mrb[0].mxu0
        %v386 = vadd.f32 %v189, %v385
        %387 = vmatprep.mubr.f32.mxu0 0.0
        %388 = vmatmul.mubr.f32.gmra.mrb[0].mxu0 %v209
        %v389 = vpop.f32.mrb[0].mxu0
        %v390 = vadd.f32 %v194, %v389
        %v391 = vpop.f32.mrb[0].mxu0
        %v392 = vadd.f32 %v194, %v391
        %393 = vmatprep.mubr.f32.mxu0 0.0
        %394 = vmatmul.mubr.f32.gmra.mrb[0].mxu0 %v211
        %v395 = vpop.f32.mrb[0].mxu0
        %v396 = vadd.f32 %v199, %v395
        %v397 = vpop.f32.mrb[0].mxu0
        %v398 = vadd.f32 %v199, %v397
        %399 = vmatprep.mubr.f32.mxu0 0.0
        %400 = vmatmul.mubr.f32.gmra.mrb[0].mxu0 %v213
        %v401 = vpop.f32.mrb[0].mxu0
        %v402 = vadd.f32 %v204, %v401
        %v403 = vpop.f32.mrb[0].mxu0
        %v404 = vadd.f32 %v204, %v403
        %405 = vdwg.mxu0
        %v406 = vmax.f32 %v295, 0.0
        %v407 = vmax.f32 %v297, 0.0
        %v408 = vmax.f32 %v384, 0.0
        %v409 = vmax.f32 %v386, 0.0
        %v410 = vmax.f32 %v301, 0.0
        %v411 = vmax.f32 %v303, 0.0
        %v412 = vmax.f32 %v390, 0.0
        %v413 = vmax.f32 %v392, 0.0
        %v414 = vmax.f32 %v307, 0.0
        %v415 = vmax.f32 %v309, 0.0
        %v416 = vmax.f32 %v396, 0.0
        %v417 = vmax.f32 %v398, 0.0
        %v418 = vmax.f32 %v313, 0.0
        %v419 = vmax.f32 %v315, 0.0
        %v420 = vmax.f32 %v402, 0.0
        %v421 = vmax.f32 %v404, 0.0
        %423 = vset.pattern.permute.xlu0 32
        %424 = vperm.xlu0 %423, %v181
        %v425 = vpop.permute.xlu0 %424
        %vm427 = vcmask 261120
        %v428 = vsel %vm427, %v181, 0
        %430 = vmatprep.subr.mxu0 %v407
        %431 = vmatpush1.msra.mxu0 %v406
        %432 = vmatprep.subr.mxu0 %v411
        %433 = vmatpush1.msra.mxu0 %v410
        %434 = vmatprep.subr.mxu0 %v415
        %435 = vmatpush1.msra.mxu0 %v414
        %436 = vmatprep.subr.mxu0 %v419
        %437 = vmatpush1.msra.mxu0 %v418
        %438 = vmatprep.subr.mxu0 0.0
        %439 = vmatpush1.msra.mxu0 0.0
        %440 = vmatprep.subr.mxu0 0.0
        %441 = vmatpush1.msra.mxu0 0.0
        %442 = vmatprep.subr.mxu0 0.0
        %443 = vmatpush1.msra.mxu0 0.0
        %444 = vmatprep.subr.mxu0 0.0
        %445 = vmatpush1.msra.mxu0 0.0
        %446 = vmatprep.subr.mxu0 0.0
        %447 = vmatpush1.msra.mxu0 0.0
        %448 = vmatprep.subr.mxu0 0.0
        %449 = vmatpush1.msra.mxu0 0.0
        %450 = vmatprep.subr.mxu0 0.0
        %451 = vmatpush1.msra.mxu0 0.0
        %452 = vmatprep.subr.mxu0 0.0
        %453 = vmatpush1.msra.mxu0 0.0
        %454 = vmatprep.subr.mxu0 0.0
        %455 = vmatpush1.msra.mxu0 0.0
        %456 = vmatprep.subr.mxu0 0.0
        %457 = vmatpush1.msra.mxu0 0.0
        %458 = vmatprep.subr.mxu0 0.0
        %459 = vmatpush1.msra.mxu0 0.0
        %460 = vmatprep.subr.mxu0 0.0
        %461 = vmatpush1.msra.mxu0 0.0
        %462 = vmatprep.subr.mxu0 0.0
        %463 = vmatpush1.msra.mxu0 0.0
        %464 = vmatprep.subr.mxu0 0.0
        %465 = vmatpush1.msra.mxu0 0.0
        %466 = vmatprep.subr.mxu0 0.0
        %467 = vmatpush1.msra.mxu0 0.0
        %468 = vmatprep.subr.mxu0 0.0
        %469 = vmatpush1.msra.mxu0 0.0
        %470 = vmatprep.subr.mxu0 0.0
        %471 = vmatpush1.msra.mxu0 0.0
        %472 = vmatprep.subr.mxu0 0.0
        %473 = vmatpush1.msra.mxu0 0.0
        %474 = vmatprep.subr.mxu0 0.0
        %475 = vmatpush1.msra.mxu0 0.0
        %476 = vmatprep.subr.mxu0 0.0
        %477 = vmatpush1.msra.mxu0 0.0
        %478 = vmatprep.subr.mxu0 0.0
        %479 = vmatpush1.msra.mxu0 0.0
        %480 = vmatprep.subr.mxu0 0.0
        %481 = vmatpush1.msra.mxu0 0.0
        %482 = vmatprep.subr.mxu0 0.0
        %483 = vmatpush1.msra.mxu0 0.0
        %484 = vmatprep.subr.mxu0 0.0
        %485 = vmatpush1.msra.mxu0 0.0
        %486 = vmatprep.subr.mxu0 0.0
        %487 = vmatpush1.msra.mxu0 0.0
        %488 = vmatprep.subr.mxu0 0.0
        %489 = vmatpush1.msra.mxu0 0.0
        %490 = vmatprep.subr.mxu0 0.0
        %491 = vmatpush1.msra.mxu0 0.0
        %492 = vmatprep.subr.mxu0 0.0
        %493 = vmatpush1.msra.mxu0 0.0
        %494 = vmatprep.mubr.f32.mxu0 0.0
        %495 = vmatmul.mubr.f32.gmra.mrb[0].mxu0 %v428
        %v496 = vpop.f32.mrb[0].mxu0
        %v497 = vadd.f32 %v425, %v496
        %v498 = vpop.f32.mrb[0].mxu0
        %v499 = vadd.f32 %v425, %v498
        %500 = vdwg.mxu0
        %501 = vmatprep.subr.mxu0 %v409
        %502 = vmatpush1.msra.mxu0 %v408
        %503 = vmatprep.subr.mxu0 %v413
        %504 = vmatpush1.msra.mxu0 %v412
        %505 = vmatprep.subr.mxu0 %v417
        %506 = vmatpush1.msra.mxu0 %v416
        %507 = vmatprep.subr.mxu0 %v421
        %508 = vmatpush1.msra.mxu0 %v420
        %509 = vmatprep.subr.mxu0 0.0
        %510 = vmatpush1.msra.mxu0 0.0
        %511 = vmatprep.subr.mxu0 0.0
        %512 = vmatpush1.msra.mxu0 0.0
        %513 = vmatprep.subr.mxu0 0.0
        %514 = vmatpush1.msra.mxu0 0.0
        %515 = vmatprep.subr.mxu0 0.0
        %516 = vmatpush1.msra.mxu0 0.0
        %517 = vmatprep.subr.mxu0 0.0
        %518 = vmatpush1.msra.mxu0 0.0
        %519 = vmatprep.subr.mxu0 0.0
        %520 = vmatpush1.msra.mxu0 0.0
        %521 = vmatprep.subr.mxu0 0.0
        %522 = vmatpush1.msra.mxu0 0.0
        %523 = vmatprep.subr.mxu0 0.0
        %524 = vmatpush1.msra.mxu0 0.0
        %525 = vmatprep.subr.mxu0 0.0
        %526 = vmatpush1.msra.mxu0 0.0
        %527 = vmatprep.subr.mxu0 0.0
        %528 = vmatpush1.msra.mxu0 0.0
        %529 = vmatprep.subr.mxu0 0.0
        %530 = vmatpush1.msra.mxu0 0.0
        %531 = vmatprep.subr.mxu0 0.0
        %532 = vmatpush1.msra.mxu0 0.0
        %533 = vmatprep.subr.mxu0 0.0
        %534 = vmatpush1.msra.mxu0 0.0
        %535 = vmatprep.subr.mxu0 0.0
        %536 = vmatpush1.msra.mxu0 0.0
        %537 = vmatprep.subr.mxu0 0.0
        %538 = vmatpush1.msra.mxu0 0.0
        %539 = vmatprep.subr.mxu0 0.0
        %540 = vmatpush1.msra.mxu0 0.0
        %541 = vmatprep.subr.mxu0 0.0
        %542 = vmatpush1.msra.mxu0 0.0
        %543 = vmatprep.subr.mxu0 0.0
        %544 = vmatpush1.msra.mxu0 0.0
        %545 = vmatprep.subr.mxu0 0.0
        %546 = vmatpush1.msra.mxu0 0.0
        %547 = vmatprep.subr.mxu0 0.0
        %548 = vmatpush1.msra.mxu0 0.0
        %549 = vmatprep.subr.mxu0 0.0
        %550 = vmatpush1.msra.mxu0 0.0
        %551 = vmatprep.subr.mxu0 0.0
        %552 = vmatpush1.msra.mxu0 0.0
        %553 = vmatprep.subr.mxu0 0.0
        %554 = vmatpush1.msra.mxu0 0.0
        %555 = vmatprep.subr.mxu0 0.0
        %556 = vmatpush1.msra.mxu0 0.0
        %557 = vmatprep.subr.mxu0 0.0
        %558 = vmatpush1.msra.mxu0 0.0
        %559 = vmatprep.subr.mxu0 0.0
        %560 = vmatpush1.msra.mxu0 0.0
        %561 = vmatprep.subr.mxu0 0.0
        %562 = vmatpush1.msra.mxu0 0.0
        %563 = vmatprep.subr.mxu0 0.0
        %564 = vmatpush1.msra.mxu0 0.0
        %565 = vmatprep.mubr.f32.mxu0 0.0
        %566 = vmatmul.mubr.f32.gmra.mrb[0].mxu0 %v428
        %v567 = vpop.f32.mrb[0].mxu0
        %v568 = vadd.f32 %v425, %v567
        %v569 = vpop.f32.mrb[0].mxu0
        %v570 = vadd.f32 %v425, %v569
        %571 = vdwg.mxu0
        %vm572 = vcmask 1042432
        %v573 = vsel %vm572, %v497, -inf
        %v574 = vrot.slane %v573, 4
        %v575 = vmax.f32 %v573, %v574
        %v576 = vrot.slane %v575, 2
        %v577 = vmax.f32 %v575, %v576
        %v578 = vrot.slane %v577, 1
        %v579 = vmax.f32 %v577, %v578
        %v580 = vsel %vm572, %v499, -inf
        %v581 = vrot.slane %v580, 4
        %v582 = vmax.f32 %v580, %v581
        %v583 = vrot.slane %v582, 2
        %v584 = vmax.f32 %v582, %v583
        %v585 = vrot.slane %v584, 1
        %v586 = vmax.f32 %v584, %v585
        %v587 = vsel %vm572, %v568, -inf
        %v588 = vrot.slane %v587, 4
        %v589 = vmax.f32 %v587, %v588
        %v590 = vrot.slane %v589, 2
        %v591 = vmax.f32 %v589, %v590
        %v592 = vrot.slane %v591, 1
        %v593 = vmax.f32 %v591, %v592
        %v594 = vsel %vm572, %v570, -inf
        %v595 = vrot.slane %v594, 4
        %v596 = vmax.f32 %v594, %v595
        %v597 = vrot.slane %v596, 2
        %v598 = vmax.f32 %v596, %v597
        %v599 = vrot.slane %v598, 1
        %v600 = vmax.f32 %v598, %v599
        %v601 = vsub.f32 %v497, %v579
        %v602 = vsub.f32 %v499, %v586
        %v603 = vsub.f32 %v568, %v593
        %v604 = vsub.f32 %v570, %v600
        %v605 = vmul.f32 %v601, 1.442695
        %v606 = vpow.pop %v605
        %v607 = vmul.f32 %v602, 1.442695
        %v608 = vpow.pop %v607
        %v609 = vmul.f32 %v603, 1.442695
        %v610 = vpow.pop %v609
        %v611 = vmul.f32 %v604, 1.442695
        %v612 = vpow.pop %v611
        %v613 = vsel %vm572, %v606, 0.0
        %v614 = vrot.slane %v613, 4
        %v615 = vadd.f32 %v613, %v614
        %v616 = vrot.slane %v615, 2
        %v617 = vadd.f32 %v615, %v616
        %v618 = vrot.slane %v617, 1
        %v619 = vadd.f32 %v617, %v618
        %v620 = vsel %vm572, %v608, 0.0
        %v621 = vrot.slane %v620, 4
        %v622 = vadd.f32 %v620, %v621
        %v623 = vrot.slane %v622, 2
        %v624 = vadd.f32 %v622, %v623
        %v625 = vrot.slane %v624, 1
        %v626 = vadd.f32 %v624, %v625
        %v627 = vsel %vm572, %v610, 0.0
        %v628 = vrot.slane %v627, 4
        %v629 = vadd.f32 %v627, %v628
        %v630 = vrot.slane %v629, 2
        %v631 = vadd.f32 %v629, %v630
        %v632 = vrot.slane %v631, 1
        %v633 = vadd.f32 %v631, %v632
        %v634 = vsel %vm572, %v612, 0.0
        %v635 = vrot.slane %v634, 4
        %v636 = vadd.f32 %v634, %v635
        %v637 = vrot.slane %v636, 2
        %v638 = vadd.f32 %v636, %v637
        %v639 = vrot.slane %v638, 1
        %v640 = vadd.f32 %v638, %v639
        %v641 = vrcp.pop %v619
        %v642 = vmul.f32 %v606, %v641
        %v643 = vrcp.pop %v626
        %v644 = vmul.f32 %v608, %v643
        %v645 = vrcp.pop %v633
        %v646 = vmul.f32 %v610, %v645
        %v647 = vrcp.pop %v640
        %v648 = vmul.f32 %v612, %v647
        %v653 = vcombine.low %v642, %v644
        %v654 = vcombine.low %v646, %v648
        %657 = vst [vmem:[%s174] sm:$0x77] %v653
        %658 = vst [vmem:[%s174 + $0x8] sm:$0x77] %v654
        %s659 = sand.u32 %s75, 1
        %s660 = scalar_lea.sflag [#allocation4], %s659
        %s661 = sand.u32 %s75, 1
        %s662 = smul.addr %s661, 16
        %s663 = scalar_lea.vmem [#allocation7], %s662
        // Predicated region
        $region37: #{tpu_custom_call.1} parent=27 // pred_check
          %p664 = pneg %p85
        $region38: #{tpu_custom_call.1} parent=27 // pred_check_branch
          %666 = sbr.rel (%p664) target = $region40
        $region39: #{tpu_custom_call.1} parent=27 // pred_region
          %s667 = smul.u32 4, %s20
          %s669 = ssub.s32 256, 256
          %670 = vsyncadd %s660, %s669
          %s671 = smul.addr %s667, 64
          %s672 = scalar_lea.hbm %s2, %s671
          %s674 = sshll.u32 %s663, 4
          %s675 = int_to_ptr.vmem [resolvable:$true] %s674
          %677 = dma.vmem_to_hbm [thread:$0]  %s675, 256, %s672, %s660
        $region40: #{tpu_custom_call.1} parent=27 // pred_fallthru
          _
      $region28: #{tpu_custom_call.1} parent=5 // pred_fallthru
        _
      %p678 = scmp.le.s32.totalorder 2, %s15
      // Predicated region
      $region41: #{tpu_custom_call.1} parent=5 // pred_check
        %p679 = pneg %p678
      $region42: #{tpu_custom_call.1} parent=5 // pred_check_branch
        %681 = sbr.rel (%p679) target = $region44
      $region43: #{tpu_custom_call.1} parent=5 // pred_region
        %s682 = ssub.s32 %s15, 2
        // Predicated region
        $region45: #{tpu_custom_call.1} parent=43 // pred_check
          %p683 = pneg %p91
        $region46: #{tpu_custom_call.1} parent=43 // pred_check_branch
          %685 = sbr.rel (%p683) target = $region48
        $region47: #{tpu_custom_call.1} parent=43 // pred_region
          %s686 = sand.u32 %s76, 1
          %s687 = scalar_lea.sflag [#allocation4], %s686
          %s688 = sand.u32 %s76, 1
          %s689 = smul.addr %s688, 16
          %s690 = scalar_lea.vmem [#allocation7], %s689
          %691 = dma.done %s687, 256
        $region48: #{tpu_custom_call.1} parent=43 // pred_fallthru
          _
      $region44: #{tpu_custom_call.1} parent=5 // pred_fallthru
        _
    $region6: #{tpu_custom_call.1} parent=1 // loop_footer
      %s19 = sadd.s32 1, %s15
    $region7: #{tpu_custom_call.1} parent=1 // loop_footer_branch
      %14 = sbr.rel target = $region3
    $region8: #{tpu_custom_call.1} parent=1 // loop_exit
      _
    %692 = vsyncpa [#allocation3], 1
    %s693 = scalar_lea.sflag [#allocation3], 1
    %694 = vsyncpa %s693, 1
    %695 = vsyncpa [#allocation6], 1
    %696 = vsyncpa [#allocation4], 1
    %s697 = scalar_lea.sflag [#allocation4], 1
    %698 = vsyncpa %s697, 1

</llo_original>
